<compile_context>
chip_gen: v6e
topology: v6e:2x2x1
jax: 0.10.0
libtpu: 0.0.40
codegen_flags: <defaults>
</compile_context>

<pallas_src>
import jax
import jax.numpy as jnp
from jax.experimental import pallas as pl
from jax.experimental.pallas import tpu as pltpu


# ----------------------------------------------------------------------------
# Kernel
# ----------------------------------------------------------------------------
def _make_kernel(z_dim: int, transition_dim: int, mxu_dtype):
    Z, T = z_dim, transition_dim
    H2 = 2 * T

    def kernel(z_ref, x_ref,
               wz_ref, bz_ref, wx_ref, bx_ref,
               w2_ref, b2_ref, wsz_ref,
               out_ref):
        def dot(a, w_ref):
            # MXU operands in mxu_dtype (bf16 on the perf path), f32 accumulate;
            # every elementwise op below stays f32.
            return jnp.dot(a.astype(mxu_dtype), w_ref[...],
                           preferred_element_type=jnp.float32)

        z = z_ref[...]
        x = x_ref[...]

        # --- fused first-stage matmuls (weights packed once in the wrapper) --
        zf = dot(z, wz_ref) + bz_ref[...]          # (TB, 2T + Z)
        xf = dot(x, wx_ref) + bx_ref[...]          # (TB, 2T + 2Z)

        # One full-width (2T-lane) ReLU slab for both hidden paths.
        h = jnp.maximum(zf[:, :H2], 0.0) + jnp.maximum(xf[:, :H2], 0.0)
        loc_z = zf[:, H2:]                         # (TB, Z)   z @ Wzl + bzl
        tail_x = xf[:, H2:]                        # (TB, 2Z)  [loc_x | sig_x]
        loc_x = tail_x[:, :Z]
        sig_x = tail_x[:, Z:]

        # --- fused second stage: [gate_pre | proposed_mean] in one MXU push --
        gp = dot(h, w2_ref) + b2_ref[...]          # (TB, 2Z)
        gate_pre = gp[:, :Z]
        proposed_mean = gp[:, Z:]

        # sigmoid via EUP tanh (no fp32 divide on the VALU)
        gate = 0.5 * jnp.tanh(0.5 * gate_pre) + 0.5

        # loc = (1-g)*loc_z + g*(loc_z + loc_x) == loc_z + g*loc_x  (exact)
        loc = loc_z + gate * loc_x

        # scale = softplus(relu(pm) @ Wsz + x @ Wsx + bsig)  (stable softplus)
        pre = dot(jnp.maximum(proposed_mean, 0.0), wsz_ref) + sig_x
        scale = jnp.maximum(pre, 0.0) + jnp.log1p(jnp.exp(-jnp.abs(pre)))

        # single contiguous (TB, 2Z) store: [loc | scale]
        out_ref[...] = jnp.concatenate([loc, scale], axis=-1).astype(out_ref.dtype)

    return kernel


# ----------------------------------------------------------------------------
# Parameters
# ----------------------------------------------------------------------------
def init_params(key, z_dim, input_dim, transition_dim, dtype=jnp.float32):
    """Deterministic parameters, PyTorch nn.Linear-style uniform init."""
    def linear(k, fan_in, fan_out):
        kw, kb = jax.random.split(k)
        bound = 1.0 / jnp.sqrt(fan_in)
        w = jax.random.uniform(kw, (fan_in, fan_out), dtype, -bound, bound)  # (in, out)
        b = jax.random.uniform(kb, (1, fan_out), dtype, -bound, bound)
        return w, b

    ks = jax.random.split(key, 8)
    p = {}
    p["wgz"], p["bgz"] = linear(ks[0], z_dim, transition_dim)
    p["wgx"], p["bgx"] = linear(ks[1], input_dim, transition_dim)
    p["wgh"], p["bgh"] = linear(ks[2], transition_dim, z_dim)
    p["wpz"], p["bpz"] = linear(ks[3], z_dim, transition_dim)
    p["wpx"], p["bpx"] = linear(ks[4], input_dim, transition_dim)
    p["wph"], p["bph"] = linear(ks[5], transition_dim, z_dim)
    # lin_sig: torch weight is (z_dim, z_dim + input_dim); split the concat
    wsig, bsig = linear(ks[6], z_dim + input_dim, z_dim)
    p["wsz"] = wsig[:z_dim, :]           # multiplies relu(proposed_mean)
    p["wsx"] = wsig[z_dim:, :]           # multiplies x_t
    p["bsig"] = bsig
    # lin_z_to_loc: identity weight, zero bias (as initialized in the module)
    p["wzl"] = jnp.eye(z_dim, dtype=dtype)
    p["bzl"] = jnp.zeros((1, z_dim), dtype=dtype)
    p["wxl"], p["bxl"] = linear(ks[7], input_dim, z_dim)
    return p


def pack_params(p, mxu_dtype=jnp.bfloat16):
    """Fuse per-layer weights along the output dim (done ONCE, off the hot path).

    mxu_dtype: dtype of the matmul operands (bf16 = MXU-native on v5e/v6e/v7x).
    Biases stay f32 (added to the f32 MXU accumulator).
    """
    T, Z = p["wgh"].shape
    zeros = jnp.zeros((T, Z), p["wgh"].dtype)
    # block-diagonal second stage: h(2T) @ [[Wgh, 0], [0, Wph]] -> [gate_pre | pm]
    w2 = jnp.block([[p["wgh"], zeros], [zeros, p["wph"]]])        # (2T, 2Z)
    return {
        "wz": jnp.concatenate([p["wgz"], p["wpz"], p["wzl"]], axis=1).astype(mxu_dtype),
        "bz": jnp.concatenate([p["bgz"], p["bpz"], p["bzl"]], axis=1),
        "wx": jnp.concatenate([p["wgx"], p["wpx"], p["wxl"], p["wsx"]],
                              axis=1).astype(mxu_dtype),
        "bx": jnp.concatenate([p["bgx"], p["bpx"], p["bxl"], p["bsig"]], axis=1),
        "w2": w2.astype(mxu_dtype),
        "b2": jnp.concatenate([p["bgh"], p["bph"]], axis=1),
        "wsz": p["wsz"].astype(mxu_dtype),
    }


# ----------------------------------------------------------------------------
# Wrapper
# ----------------------------------------------------------------------------
def _round_up(n, m):
    return ((n + m - 1) // m) * m


def transition_forward(z_t_1, x_t, packed, *, block_b=2048,
                       vmem_limit_bytes=32 * 1024 * 1024):
    B, Zin = z_t_1.shape
    _, X = x_t.shape
    T = packed["w2"].shape[0] // 2       # transition_dim
    Z = packed["w2"].shape[1] // 2       # z_dim
    dtype = z_t_1.dtype
    mxu_dtype = packed["wz"].dtype

    # --- batch-tile selection (no hot-path padding) -------------------------
    # >= 2 grid steps whenever the batch can be split so the "parallel" axis
    # shards across both TensorCores on v7x; tile is a multiple of 8 sublanes,
    # capped at block_b (per-row footprint ~3 KB f32, so even 4096 rows fit the
    # 32 MiB scoped VMEM on every generation incl. v7x).  Ragged last block is
    # handled by Pallas boundary masking (rows are independent).
    if B <= 8:
        tb = B
    else:
        steps = max(2, pl.cdiv(B, block_b))
        tb = min(_round_up(pl.cdiv(B, steps), 8), block_b)
    grid = (pl.cdiv(B, tb),)

    w_args = (packed["wz"], packed["bz"], packed["wx"], packed["bx"],
              packed["w2"], packed["b2"], packed["wsz"])

    def resident(a):
        # constant index_map -> weights/biases stay VMEM-resident across steps
        return pl.BlockSpec(a.shape, lambda i: (0, 0))

    out = pl.pallas_call(
        _make_kernel(Z, T, mxu_dtype),
        out_shape=jax.ShapeDtypeStruct((B, 2 * Z), dtype),
        grid=grid,
        in_specs=[pl.BlockSpec((tb, Zin), lambda i: (i, 0)),
                  pl.BlockSpec((tb, X), lambda i: (i, 0))]
                 + [resident(a) for a in w_args],
        out_specs=pl.BlockSpec((tb, 2 * Z), lambda i: (i, 0)),
        compiler_params=pltpu.CompilerParams(
            dimension_semantics=("parallel",),
            vmem_limit_bytes=vmem_limit_bytes),
    )(z_t_1, x_t, *w_args)

    return out[:, :Z], out[:, Z:]


# ----------------------------------------------------------------------------
# Pure-JAX reference (mirrors the PyTorch forward exactly, unfused params)
# ----------------------------------------------------------------------------
def transition_forward_ref(z_t_1, x_t, p):
    relu = lambda v: jnp.maximum(v, 0.0)
    _gate = relu(z_t_1 @ p["wgz"] + p["bgz"]) + relu(x_t @ p["wgx"] + p["bgx"])
    gate = jax.nn.sigmoid(_gate @ p["wgh"] + p["bgh"])
    _pm = relu(z_t_1 @ p["wpz"] + p["bpz"]) + relu(x_t @ p["wpx"] + p["bpx"])
    proposed_mean = _pm @ p["wph"] + p["bph"]
    loc_z = z_t_1 @ p["wzl"] + p["bzl"]
    loc_x = x_t @ p["wxl"] + p["bxl"]
    loc = (1.0 - gate) * loc_z + gate * (loc_z + loc_x)
    pre = relu(proposed_mean) @ p["wsz"] + x_t @ p["wsx"] + p["bsig"]
    scale = jax.nn.softplus(pre)
    return loc, scale


if __name__ == "__main__":
    B, Z_DIM, INPUT_DIM, TRANSITION_DIM = 8, 32, 16, 64

    key = jax.random.PRNGKey(0)
    k_params, k_z, k_x = jax.random.split(key, 3)
    params = init_params(k_params, Z_DIM, INPUT_DIM, TRANSITION_DIM)

    z_t_1 = jax.random.normal(k_z, (B, Z_DIM), jnp.float32)
    x_t = jax.random.normal(k_x, (B, INPUT_DIM), jnp.float32)

    loc_ref, scale_ref = transition_forward_ref(z_t_1, x_t, params)

    # --- exact-precision path (f32 MXU operands): strict check --------------
    packed_f32 = pack_params(params, mxu_dtype=jnp.float32)
    loc, scale = transition_forward(z_t_1, x_t, packed_f32)
    jax.block_until_ready((loc, scale))
    assert loc.shape == (B, Z_DIM) and scale.shape == (B, Z_DIM)
    assert jnp.allclose(loc, loc_ref, atol=1e-5, rtol=1e-5)
    assert jnp.allclose(scale, scale_ref, atol=1e-5, rtol=1e-5)
    assert bool(jnp.all(scale > 0.0))

    # --- perf path (bf16 MXU operands, f32 elementwise): loose check --------
    packed_bf16 = pack_params(params, mxu_dtype=jnp.bfloat16)
    loc_b, scale_b = transition_forward(z_t_1, x_t, packed_bf16)
    jax.block_until_ready((loc_b, scale_b))
    assert jnp.allclose(loc_b, loc_ref, atol=5e-2, rtol=5e-2)
    assert jnp.allclose(scale_b, scale_ref, atol=5e-2, rtol=5e-2)
    assert bool(jnp.all(scale_b > 0.0))

    print("KERNEL_OK")
</pallas_src>

<mosaic_0001>
module attributes {stable_mosaic.version = 11 : i64} {
  func.func @kernel(%arg0: i32, %arg1: memref<8x32xf32, #tpu.memory_space<vmem>>, %arg2: memref<8x16xf32, #tpu.memory_space<vmem>>, %arg3: memref<32x160xf32, #tpu.memory_space<vmem>>, %arg4: memref<1x160xf32, #tpu.memory_space<vmem>>, %arg5: memref<16x192xf32, #tpu.memory_space<vmem>>, %arg6: memref<1x192xf32, #tpu.memory_space<vmem>>, %arg7: memref<128x64xf32, #tpu.memory_space<vmem>>, %arg8: memref<1x64xf32, #tpu.memory_space<vmem>>, %arg9: memref<32x32xf32, #tpu.memory_space<vmem>>, %arg10: memref<8x64xf32, #tpu.memory_space<vmem>>) attributes {dimension_semantics = [#tpu.dimension_semantics<parallel>], iteration_bounds = array<i64: 1>, scalar_prefetch = 0 : i64, scratch_operands = 0 : i64, tpu.core_type = #tpu.core_type<tc>, window_params = [{transform_indices = @transform_0, window_bounds = array<i64: 8, 32>}, {transform_indices = @transform_1, window_bounds = array<i64: 8, 16>}, {pipeline_mode = #tpu.pipeline_mode<synchronous>, transform_indices = @transform_2, window_bounds = array<i64: 32, 160>}, {pipeline_mode = #tpu.pipeline_mode<synchronous>, transform_indices = @transform_3, window_bounds = array<i64: 1, 160>}, {pipeline_mode = #tpu.pipeline_mode<synchronous>, transform_indices = @transform_4, window_bounds = array<i64: 16, 192>}, {pipeline_mode = #tpu.pipeline_mode<synchronous>, transform_indices = @transform_5, window_bounds = array<i64: 1, 192>}, {pipeline_mode = #tpu.pipeline_mode<synchronous>, transform_indices = @transform_6, window_bounds = array<i64: 128, 64>}, {pipeline_mode = #tpu.pipeline_mode<synchronous>, transform_indices = @transform_7, window_bounds = array<i64: 1, 64>}, {pipeline_mode = #tpu.pipeline_mode<synchronous>, transform_indices = @transform_8, window_bounds = array<i64: 32, 32>}, {transform_indices = @transform_9, window_bounds = array<i64: 8, 64>}]} {
    %c0 = arith.constant 0 : index
    %c0_0 = arith.constant 0 : index
    %0 = vector.load %arg1[%c0, %c0_0] : memref<8x32xf32, #tpu.memory_space<vmem>>, vector<8x32xf32>
    %c0_1 = arith.constant 0 : index
    %c0_2 = arith.constant 0 : index
    %1 = vector.load %arg2[%c0_1, %c0_2] : memref<8x16xf32, #tpu.memory_space<vmem>>, vector<8x16xf32>
    %c0_3 = arith.constant 0 : index
    %c0_4 = arith.constant 0 : index
    %2 = vector.load %arg3[%c0_3, %c0_4] : memref<32x160xf32, #tpu.memory_space<vmem>>, vector<32x160xf32>
    %cst = arith.constant dense<0.000000e+00> : vector<8x160xf32>
    %3 = tpu.matmul %0, %2, %cst {dimension_numbers = #tpu.dot_dimension_numbers<[1], [0], [0], [1], [0, 0, 1, 1], [], []>} : vector<8x32xf32>, vector<32x160xf32>, vector<8x160xf32> -> vector<8x160xf32>
    %c0_5 = arith.constant 0 : index
    %c0_6 = arith.constant 0 : index
    %4 = vector.load %arg4[%c0_5, %c0_6] : memref<1x160xf32, #tpu.memory_space<vmem>>, vector<1x160xf32>
    %5 = vector.broadcast %4 : vector<1x160xf32> to vector<8x160xf32>
    %6 = arith.addf %3, %5 : vector<8x160xf32>
    %c0_7 = arith.constant 0 : index
    %c0_8 = arith.constant 0 : index
    %7 = vector.load %arg5[%c0_7, %c0_8] : memref<16x192xf32, #tpu.memory_space<vmem>>, vector<16x192xf32>
    %cst_9 = arith.constant dense<0.000000e+00> : vector<8x192xf32>
    %8 = tpu.matmul %1, %7, %cst_9 {dimension_numbers = #tpu.dot_dimension_numbers<[1], [0], [0], [1], [0, 0, 1, 1], [], []>} : vector<8x16xf32>, vector<16x192xf32>, vector<8x192xf32> -> vector<8x192xf32>
    %c0_10 = arith.constant 0 : index
    %c0_11 = arith.constant 0 : index
    %9 = vector.load %arg6[%c0_10, %c0_11] : memref<1x192xf32, #tpu.memory_space<vmem>>, vector<1x192xf32>
    %10 = vector.broadcast %9 : vector<1x192xf32> to vector<8x192xf32>
    %11 = arith.addf %8, %10 : vector<8x192xf32>
    %12 = vector.extract_strided_slice %6 {offsets = [0, 0], sizes = [8, 128], strides = [1, 1]} : vector<8x160xf32> to vector<8x128xf32>
    %cst_12 = arith.constant 0.000000e+00 : f32
    %13 = vector.broadcast %cst_12 : f32 to vector<8x128xf32>
    %14 = arith.maximumf %12, %13 : vector<8x128xf32>
    %15 = vector.extract_strided_slice %11 {offsets = [0, 0], sizes = [8, 128], strides = [1, 1]} : vector<8x192xf32> to vector<8x128xf32>
    %cst_13 = arith.constant 0.000000e+00 : f32
    %16 = vector.broadcast %cst_13 : f32 to vector<8x128xf32>
    %17 = arith.maximumf %15, %16 : vector<8x128xf32>
    %18 = arith.addf %14, %17 : vector<8x128xf32>
    %19 = vector.extract_strided_slice %6 {offsets = [0, 128], sizes = [8, 32], strides = [1, 1]} : vector<8x160xf32> to vector<8x32xf32>
    %20 = vector.extract_strided_slice %11 {offsets = [0, 128], sizes = [8, 64], strides = [1, 1]} : vector<8x192xf32> to vector<8x64xf32>
    %21 = vector.extract_strided_slice %20 {offsets = [0, 0], sizes = [8, 32], strides = [1, 1]} : vector<8x64xf32> to vector<8x32xf32>
    %22 = vector.extract_strided_slice %20 {offsets = [0, 32], sizes = [8, 32], strides = [1, 1]} : vector<8x64xf32> to vector<8x32xf32>
    %c0_14 = arith.constant 0 : index
    %c0_15 = arith.constant 0 : index
    %23 = vector.load %arg7[%c0_14, %c0_15] : memref<128x64xf32, #tpu.memory_space<vmem>>, vector<128x64xf32>
    %cst_16 = arith.constant dense<0.000000e+00> : vector<8x64xf32>
    %24 = tpu.matmul %18, %23, %cst_16 {dimension_numbers = #tpu.dot_dimension_numbers<[1], [0], [0], [1], [0, 0, 1, 1], [], []>} : vector<8x128xf32>, vector<128x64xf32>, vector<8x64xf32> -> vector<8x64xf32>
    %c0_17 = arith.constant 0 : index
    %c0_18 = arith.constant 0 : index
    %25 = vector.load %arg8[%c0_17, %c0_18] : memref<1x64xf32, #tpu.memory_space<vmem>>, vector<1x64xf32>
    %26 = vector.broadcast %25 : vector<1x64xf32> to vector<8x64xf32>
    %27 = arith.addf %24, %26 : vector<8x64xf32>
    %28 = vector.extract_strided_slice %27 {offsets = [0, 0], sizes = [8, 32], strides = [1, 1]} : vector<8x64xf32> to vector<8x32xf32>
    %29 = vector.extract_strided_slice %27 {offsets = [0, 32], sizes = [8, 32], strides = [1, 1]} : vector<8x64xf32> to vector<8x32xf32>
    %cst_19 = arith.constant 5.000000e-01 : f32
    %30 = vector.broadcast %cst_19 : f32 to vector<8x32xf32>
    %31 = arith.mulf %30, %28 : vector<8x32xf32>
    %32 = math.tanh %31 : vector<8x32xf32>
    %cst_20 = arith.constant 5.000000e-01 : f32
    %33 = vector.broadcast %cst_20 : f32 to vector<8x32xf32>
    %34 = arith.mulf %33, %32 : vector<8x32xf32>
    %cst_21 = arith.constant 5.000000e-01 : f32
    %35 = vector.broadcast %cst_21 : f32 to vector<8x32xf32>
    %36 = arith.addf %34, %35 : vector<8x32xf32>
    %37 = arith.mulf %36, %21 : vector<8x32xf32>
    %38 = arith.addf %19, %37 : vector<8x32xf32>
    %cst_22 = arith.constant 0.000000e+00 : f32
    %39 = vector.broadcast %cst_22 : f32 to vector<8x32xf32>
    %40 = arith.maximumf %29, %39 : vector<8x32xf32>
    %c0_23 = arith.constant 0 : index
    %c0_24 = arith.constant 0 : index
    %41 = vector.load %arg9[%c0_23, %c0_24] : memref<32x32xf32, #tpu.memory_space<vmem>>, vector<32x32xf32>
    %cst_25 = arith.constant dense<0.000000e+00> : vector<8x32xf32>
    %42 = tpu.matmul %40, %41, %cst_25 {dimension_numbers = #tpu.dot_dimension_numbers<[1], [0], [0], [1], [0, 0, 1, 1], [], []>} : vector<8x32xf32>, vector<32x32xf32>, vector<8x32xf32> -> vector<8x32xf32>
    %43 = arith.addf %42, %22 : vector<8x32xf32>
    %cst_26 = arith.constant 0.000000e+00 : f32
    %44 = vector.broadcast %cst_26 : f32 to vector<8x32xf32>
    %45 = arith.maximumf %43, %44 : vector<8x32xf32>
    %46 = math.absf %43 : vector<8x32xf32>
    %cst_27 = arith.constant 0.000000e+00 : f32
    %47 = vector.broadcast %cst_27 : f32 to vector<8x32xf32>
    %48 = arith.subf %47, %46 : vector<8x32xf32>
    %49 = math.exp %48 : vector<8x32xf32>
    %50 = math.log1p %49 : vector<8x32xf32>
    %51 = arith.addf %45, %50 : vector<8x32xf32>
    %52 = tpu.concatenate %38, %51 in 1 : vector<8x32xf32>, vector<8x32xf32> -> vector<8x64xf32>
    %c0_28 = arith.constant 0 : index
    %c0_29 = arith.constant 0 : index
    %53 = vector.load %arg10[%c0_28, %c0_29] : memref<8x64xf32, #tpu.memory_space<vmem>>, vector<8x64xf32>
    tpu.vector_store %arg10[%c0_28, %c0_29], %52 {strides = array<i32>} : memref<8x64xf32, #tpu.memory_space<vmem>>, vector<8x64xf32>,
    return
  }
  func.func @transform_0(%arg0: i32) -> (i32, i32) {
    %c0_i32 = arith.constant 0 : i32
    %c0_i32_0 = arith.constant 0 : i32
    return %arg0, %c0_i32 : i32, i32
  }
  func.func @transform_1(%arg0: i32) -> (i32, i32) {
    %c0_i32 = arith.constant 0 : i32
    %c0_i32_0 = arith.constant 0 : i32
    return %arg0, %c0_i32 : i32, i32
  }
  func.func @transform_2(%arg0: i32) -> (i32, i32) {
    %c0_i32 = arith.constant 0 : i32
    %c0_i32_0 = arith.constant 0 : i32
    %c0_i32_1 = arith.constant 0 : i32
    return %c0_i32, %c0_i32_0 : i32, i32
  }
  func.func @transform_3(%arg0: i32) -> (i32, i32) {
    %c0_i32 = arith.constant 0 : i32
    %c0_i32_0 = arith.constant 0 : i32
    %c0_i32_1 = arith.constant 0 : i32
    return %c0_i32, %c0_i32_0 : i32, i32
  }
  func.func @transform_4(%arg0: i32) -> (i32, i32) {
    %c0_i32 = arith.constant 0 : i32
    %c0_i32_0 = arith.constant 0 : i32
    %c0_i32_1 = arith.constant 0 : i32
    return %c0_i32, %c0_i32_0 : i32, i32
  }
  func.func @transform_5(%arg0: i32) -> (i32, i32) {
    %c0_i32 = arith.constant 0 : i32
    %c0_i32_0 = arith.constant 0 : i32
    %c0_i32_1 = arith.constant 0 : i32
    return %c0_i32, %c0_i32_0 : i32, i32
  }
  func.func @transform_6(%arg0: i32) -> (i32, i32) {
    %c0_i32 = arith.constant 0 : i32
    %c0_i32_0 = arith.constant 0 : i32
    %c0_i32_1 = arith.constant 0 : i32
    return %c0_i32, %c0_i32_0 : i32, i32
  }
  func.func @transform_7(%arg0: i32) -> (i32, i32) {
    %c0_i32 = arith.constant 0 : i32
    %c0_i32_0 = arith.constant 0 : i32
    %c0_i32_1 = arith.constant 0 : i32
    return %c0_i32, %c0_i32_0 : i32, i32
  }
  func.func @transform_8(%arg0: i32) -> (i32, i32) {
    %c0_i32 = arith.constant 0 : i32
    %c0_i32_0 = arith.constant 0 : i32
    %c0_i32_1 = arith.constant 0 : i32
    return %c0_i32, %c0_i32_0 : i32, i32
  }
  func.func @transform_9(%arg0: i32) -> (i32, i32) {
    %c0_i32 = arith.constant 0 : i32
    %c0_i32_0 = arith.constant 0 : i32
    return %arg0, %c0_i32 : i32, i32
  }
}

</mosaic_0001>

<llo_original>
// kernel: tpu_custom_call.1
$region0: #{tpu_custom_call.1}
  #allocation0 [shape = 'u32[]', space=smem, size = 0x4, offset = 0x4, fixed_abs, tag = 'smem constant byte address 0x4 - core index']
  #allocation1 [shape = 'u32[144,128]{1,0:T(1,128)}', space=vmem, size = 0x12000, scoped, tag = 'internal scratch']
  %s0 = inlined_call_operand.vmem [shape: f32[8,32], index: 0, kind: input, shape index: {}]
  %s1 = inlined_call_operand.vmem [shape: f32[8,16], index: 1, kind: input, shape index: {}]
  %s2 = inlined_call_operand.vmem [shape: f32[32,160], index: 2, kind: input, shape index: {}]
  %s3 = inlined_call_operand.vmem [shape: f32[1,160], index: 3, kind: input, shape index: {}]
  %s4 = inlined_call_operand.vmem [shape: f32[16,192], index: 4, kind: input, shape index: {}]
  %s5 = inlined_call_operand.vmem [shape: f32[1,192], index: 5, kind: input, shape index: {}]
  %s6 = inlined_call_operand.vmem [shape: f32[128,64], index: 6, kind: input, shape index: {}]
  %s7 = inlined_call_operand.vmem [shape: f32[1,64], index: 7, kind: input, shape index: {}]
  %s8 = inlined_call_operand.vmem [shape: f32[32,32], index: 8, kind: input, shape index: {}]
  %s9 = inlined_call_operand.hbm [shape: f32[8,64], index: 9, kind: output, shape index: {}]
  %s10 = sld [smem:[#allocation0]]
  $region46: #{tpu_custom_call.1} parent=0
    _
  %s12 = ssub.s32 1, %s10
  %s13 = scalar_select 0, %s12, %s10
  $region1: #{tpu_custom_call.1} parent=0
    #allocation2 [shape = 'u8[4096]{0}', space=vmem, size = 0x1000, scoped, tag = 'output window, operand 0, single buffered']
    #allocation3 [shape = 's32[1]{0}', space=sflag, size = 0x4, scoped, tag = 'scoped memory for tpu_custom_call.1']
    %14 = vsyncpa [#allocation3], 0
    // Predicated region
    $region2: #{tpu_custom_call.1} parent=1 // pred_check
      _
    $region3: #{tpu_custom_call.1} parent=1 // pred_check_branch
      %16 = sbr.rel (0) target = $region5
    $region4: #{tpu_custom_call.1} parent=1 // pred_region
      _
    $region5: #{tpu_custom_call.1} parent=1 // pred_fallthru
      _
    // Predicated region
    $region6: #{tpu_custom_call.1} parent=1 // pred_check
      _
    $region7: #{tpu_custom_call.1} parent=1 // pred_check_branch
      %18 = sbr.rel (0) target = $region9
    $region8: #{tpu_custom_call.1} parent=1 // pred_region
      _
    $region9: #{tpu_custom_call.1} parent=1 // pred_fallthru
      _
    // Predicated region
    $region10: #{tpu_custom_call.1} parent=1 // pred_check
      _
    $region11: #{tpu_custom_call.1} parent=1 // pred_check_branch
      %20 = sbr.rel (0) target = $region13
    $region12: #{tpu_custom_call.1} parent=1 // pred_region
      _
    $region13: #{tpu_custom_call.1} parent=1 // pred_fallthru
      _
    // Predicated region
    $region14: #{tpu_custom_call.1} parent=1 // pred_check
      _
    $region15: #{tpu_custom_call.1} parent=1 // pred_check_branch
      %22 = sbr.rel (0) target = $region17
    $region16: #{tpu_custom_call.1} parent=1 // pred_region
      _
    $region17: #{tpu_custom_call.1} parent=1 // pred_fallthru
      _
    // Predicated region
    $region18: #{tpu_custom_call.1} parent=1 // pred_check
      _
    $region19: #{tpu_custom_call.1} parent=1 // pred_check_branch
      %24 = sbr.rel (0) target = $region21
    $region20: #{tpu_custom_call.1} parent=1 // pred_region
      _
    $region21: #{tpu_custom_call.1} parent=1 // pred_fallthru
      _
    // Predicated region
    $region22: #{tpu_custom_call.1} parent=1 // pred_check
      _
    $region23: #{tpu_custom_call.1} parent=1 // pred_check_branch
      %26 = sbr.rel (0) target = $region25
    $region24: #{tpu_custom_call.1} parent=1 // pred_region
      _
    $region25: #{tpu_custom_call.1} parent=1 // pred_fallthru
      _
    // Predicated region
    $region26: #{tpu_custom_call.1} parent=1 // pred_check
      _
    $region27: #{tpu_custom_call.1} parent=1 // pred_check_branch
      %28 = sbr.rel (0) target = $region29
    $region28: #{tpu_custom_call.1} parent=1 // pred_region
      _
    $region29: #{tpu_custom_call.1} parent=1 // pred_fallthru
      _
    // Predicated region
    $region30: #{tpu_custom_call.1} parent=1 // pred_check
      _
    $region31: #{tpu_custom_call.1} parent=1 // pred_check_branch
      %30 = sbr.rel (0) target = $region33
    $region32: #{tpu_custom_call.1} parent=1 // pred_region
      _
    $region33: #{tpu_custom_call.1} parent=1 // pred_fallthru
      _
    // Predicated region
    $region34: #{tpu_custom_call.1} parent=1 // pred_check
      _
    $region35: #{tpu_custom_call.1} parent=1 // pred_check_branch
      %32 = sbr.rel (0) target = $region37
    $region36: #{tpu_custom_call.1} parent=1 // pred_region
      _
    $region37: #{tpu_custom_call.1} parent=1 // pred_fallthru
      _
    %v33 = vld [vmem:[%s0] sm:$0xff]
    %v34 = vld [vmem:[%s1] sm:$0xff]
    %v35 = vld [vmem:[%s2] sm:$0xff]
    %v36 = vld [vmem:[%s2 + $0x8] sm:$0xff]
    %v37 = vld [vmem:[%s2 + $0x10] sm:$0xff]
    %v38 = vld [vmem:[%s2 + $0x18] sm:$0xff]
    %v39 = vld [vmem:[%s2 + $0x20] sm:$0xff]
    %v40 = vld [vmem:[%s2 + $0x28] sm:$0xff]
    %v41 = vld [vmem:[%s2 + $0x30] sm:$0xff]
    %v42 = vld [vmem:[%s2 + $0x38] sm:$0xff]
    %v43 = vld [vmem:[%s3] sm:$0x3]
    %v45 = vlaneseq
    %v46 = vshrl.u32 %v45, 7
    %v47 = vsub.s32 0, %v46
    %v48 = vrot.slane %v43, %v47
    %v49 = vlaneseq
    %v50 = vshrl.u32 %v49, 7
    %v51 = vsub.s32 1, %v50
    %v52 = vrot.slane %v43, %v51
    %vm55 = vcmask 261120
    %v57 = vsel %vm55, %v33, 0
    %59 = vmatprep.subr.mxu0 0.0
    %60 = vmatpush1.msra.mxu0 0.0
    %61 = vmatprep.subr.mxu0 0.0
    %62 = vmatpush1.msra.mxu0 0.0
    %63 = vmatprep.subr.mxu0 0.0
    %64 = vmatpush1.msra.mxu0 0.0
    %65 = vmatprep.subr.mxu0 0.0
    %66 = vmatpush1.msra.mxu0 0.0
    %67 = vmatprep.subr.mxu0 0.0
    %68 = vmatpush1.msra.mxu0 0.0
    %69 = vmatprep.subr.mxu0 0.0
    %70 = vmatpush1.msra.mxu0 0.0
    %71 = vmatprep.subr.mxu0 0.0
    %72 = vmatpush1.msra.mxu0 0.0
    %73 = vmatprep.subr.mxu0 0.0
    %74 = vmatpush1.msra.mxu0 0.0
    %75 = vmatprep.subr.mxu0 0.0
    %76 = vmatpush1.msra.mxu0 0.0
    %77 = vmatprep.subr.mxu0 0.0
    %78 = vmatpush1.msra.mxu0 0.0
    %79 = vmatprep.subr.mxu0 0.0
    %80 = vmatpush1.msra.mxu0 0.0
    %81 = vmatprep.subr.mxu0 0.0
    %82 = vmatpush1.msra.mxu0 0.0
    %83 = vmatprep.subr.mxu0 %v42
    %84 = vmatpush1.msra.mxu0 %v41
    %85 = vmatprep.subr.mxu0 %v40
    %86 = vmatpush1.msra.mxu0 %v39
    %87 = vmatprep.subr.mxu0 %v38
    %88 = vmatpush1.msra.mxu0 %v37
    %89 = vmatprep.subr.mxu0 %v36
    %90 = vmatpush1.msra.mxu0 %v35
    %91 = vmatprep.subr.mxu0 0.0
    %92 = vmatpush2.msra.mxu0 0.0
    %93 = vmatprep.subr.mxu0 0.0
    %94 = vmatpush2.msra.mxu0 0.0
    %95 = vmatprep.subr.mxu0 0.0
    %96 = vmatpush2.msra.mxu0 0.0
    %97 = vmatprep.subr.mxu0 0.0
    %98 = vmatpush2.msra.mxu0 0.0
    %99 = vmatprep.subr.mxu0 0.0
    %100 = vmatpush2.msra.mxu0 0.0
    %101 = vmatprep.subr.mxu0 0.0
    %102 = vmatpush2.msra.mxu0 0.0
    %103 = vmatprep.subr.mxu0 0.0
    %104 = vmatpush2.msra.mxu0 0.0
    %105 = vmatprep.subr.mxu0 0.0
    %106 = vmatpush2.msra.mxu0 0.0
    %107 = vmatprep.subr.mxu0 0.0
    %108 = vmatpush2.msra.mxu0 0.0
    %109 = vmatprep.subr.mxu0 0.0
    %110 = vmatpush2.msra.mxu0 0.0
    %111 = vmatprep.subr.mxu0 0.0
    %112 = vmatpush2.msra.mxu0 0.0
    %113 = vmatprep.subr.mxu0 0.0
    %114 = vmatpush2.msra.mxu0 0.0
    %115 = vmatprep.subr.mxu0 0.0
    %116 = vmatpush2.msra.mxu0 0.0
    %117 = vmatprep.subr.mxu0 0.0
    %118 = vmatpush2.msra.mxu0 0.0
    %119 = vmatprep.subr.mxu0 0.0
    %120 = vmatpush2.msra.mxu0 0.0
    %121 = vmatprep.subr.mxu0 0.0
    %122 = vmatpush2.msra.mxu0 0.0
    %123 = vmatprep.mubr.f32.mxu0 0.0
    %124 = vmatmul.mubr.f32.gmra.mxu0 %v57
    %v125 = vpop.f32.mrf.mxu0
    %v126 = vadd.f32 %v48, %v125
    %v127 = vpop.f32.mrf.mxu0
    %v128 = vadd.f32 %v52, %v127
    %129 = vdwg.mxu0
    %v130 = vld [vmem:[%s4] sm:$0xff]
    %v131 = vld [vmem:[%s4 + $0x8] sm:$0xff]
    %v132 = vld [vmem:[%s4 + $0x10] sm:$0xff]
    %v133 = vld [vmem:[%s4 + $0x18] sm:$0xff]
    %v134 = vld [vmem:[%s5] sm:$0x3]
    %v136 = vlaneseq
    %v137 = vshrl.u32 %v136, 7
    %v138 = vsub.s32 0, %v137
    %v139 = vrot.slane %v134, %v138
    %v140 = vlaneseq
    %v141 = vshrl.u32 %v140, 7
    %v142 = vsub.s32 1, %v141
    %v143 = vrot.slane %v134, %v142
    %vm146 = vcmask 130048
    %v148 = vsel %vm146, %v34, 0
    %150 = vmatprep.subr.mxu0 0.0
    %151 = vmatpush1.msra.mxu0 0.0
    %152 = vmatprep.subr.mxu0 0.0
    %153 = vmatpush1.msra.mxu0 0.0
    %154 = vmatprep.subr.mxu0 0.0
    %155 = vmatpush1.msra.mxu0 0.0
    %156 = vmatprep.subr.mxu0 0.0
    %157 = vmatpush1.msra.mxu0 0.0
    %158 = vmatprep.subr.mxu0 0.0
    %159 = vmatpush1.msra.mxu0 0.0
    %160 = vmatprep.subr.mxu0 0.0
    %161 = vmatpush1.msra.mxu0 0.0
    %162 = vmatprep.subr.mxu0 0.0
    %163 = vmatpush1.msra.mxu0 0.0
    %164 = vmatprep.subr.mxu0 0.0
    %165 = vmatpush1.msra.mxu0 0.0
    %166 = vmatprep.subr.mxu0 0.0
    %167 = vmatpush1.msra.mxu0 0.0
    %168 = vmatprep.subr.mxu0 0.0
    %169 = vmatpush1.msra.mxu0 0.0
    %170 = vmatprep.subr.mxu0 0.0
    %171 = vmatpush1.msra.mxu0 0.0
    %172 = vmatprep.subr.mxu0 0.0
    %173 = vmatpush1.msra.mxu0 0.0
    %174 = vmatprep.subr.mxu0 0.0
    %175 = vmatpush1.msra.mxu0 0.0
    %176 = vmatprep.subr.mxu0 0.0
    %177 = vmatpush1.msra.mxu0 0.0
    %178 = vmatprep.subr.mxu0 %v133
    %179 = vmatpush1.msra.mxu0 %v132
    %180 = vmatprep.subr.mxu0 %v131
    %181 = vmatpush1.msra.mxu0 %v130
    %182 = vmatprep.subr.mxu0 0.0
    %183 = vmatpush2.msra.mxu0 0.0
    %184 = vmatprep.subr.mxu0 0.0
    %185 = vmatpush2.msra.mxu0 0.0
    %186 = vmatprep.subr.mxu0 0.0
    %187 = vmatpush2.msra.mxu0 0.0
    %188 = vmatprep.subr.mxu0 0.0
    %189 = vmatpush2.msra.mxu0 0.0
    %190 = vmatprep.subr.mxu0 0.0
    %191 = vmatpush2.msra.mxu0 0.0
    %192 = vmatprep.subr.mxu0 0.0
    %193 = vmatpush2.msra.mxu0 0.0
    %194 = vmatprep.subr.mxu0 0.0
    %195 = vmatpush2.msra.mxu0 0.0
    %196 = vmatprep.subr.mxu0 0.0
    %197 = vmatpush2.msra.mxu0 0.0
    %198 = vmatprep.subr.mxu0 0.0
    %199 = vmatpush2.msra.mxu0 0.0
    %200 = vmatprep.subr.mxu0 0.0
    %201 = vmatpush2.msra.mxu0 0.0
    %202 = vmatprep.subr.mxu0 0.0
    %203 = vmatpush2.msra.mxu0 0.0
    %204 = vmatprep.subr.mxu0 0.0
    %205 = vmatpush2.msra.mxu0 0.0
    %206 = vmatprep.subr.mxu0 0.0
    %207 = vmatpush2.msra.mxu0 0.0
    %208 = vmatprep.subr.mxu0 0.0
    %209 = vmatpush2.msra.mxu0 0.0
    %210 = vmatprep.subr.mxu0 0.0
    %211 = vmatpush2.msra.mxu0 0.0
    %212 = vmatprep.subr.mxu0 0.0
    %213 = vmatpush2.msra.mxu0 0.0
    %214 = vmatprep.mubr.f32.mxu0 0.0
    %215 = vmatmul.mubr.f32.gmra.mxu0 %v148
    %v216 = vpop.f32.mrf.mxu0
    %v217 = vadd.f32 %v139, %v216
    %v218 = vpop.f32.mrf.mxu0
    %v219 = vadd.f32 %v143, %v218
    %220 = vdwg.mxu0
    %v221 = vmax.f32 %v126, 0.0
    %v222 = vmax.f32 %v217, 0.0
    %v223 = vadd.f32 %v221, %v222
    %v224 = vld [vmem:[%s6] sm:$0xff]
    %v225 = vld [vmem:[%s6 + $0x8] sm:$0xff]
    %v226 = vld [vmem:[%s6 + $0x10] sm:$0xff]
    %v227 = vld [vmem:[%s6 + $0x18] sm:$0xff]
    %v228 = vld [vmem:[%s6 + $0x20] sm:$0xff]
    %v229 = vld [vmem:[%s6 + $0x28] sm:$0xff]
    %v230 = vld [vmem:[%s6 + $0x30] sm:$0xff]
    %v231 = vld [vmem:[%s6 + $0x38] sm:$0xff]
    %v232 = vld [vmem:[%s6 + $0x40] sm:$0xff]
    %v233 = vld [vmem:[%s6 + $0x48] sm:$0xff]
    %v234 = vld [vmem:[%s6 + $0x50] sm:$0xff]
    %v235 = vld [vmem:[%s6 + $0x58] sm:$0xff]
    %v236 = vld [vmem:[%s6 + $0x60] sm:$0xff]
    %v237 = vld [vmem:[%s6 + $0x68] sm:$0xff]
    %v238 = vld [vmem:[%s6 + $0x70] sm:$0xff]
    %v239 = vld [vmem:[%s6 + $0x78] sm:$0xff]
    %v240 = vld [vmem:[%s7] sm:$0x1]
    %v242 = vlaneseq
    %v243 = vshrl.u32 %v242, 7
    %v244 = vsub.s32 0, %v243
    %v245 = vrot.slane %v240, %v244
    %247 = vmatprep.subr.mxu0 0.0
    %248 = vmatpush1.msra.mxu0 %v239
    %249 = vmatprep.subr.mxu0 0.0
    %250 = vmatpush1.msra.mxu0 %v238
    %251 = vmatprep.subr.mxu0 0.0
    %252 = vmatpush1.msra.mxu0 %v237
    %253 = vmatprep.subr.mxu0 0.0
    %254 = vmatpush1.msra.mxu0 %v236
    %255 = vmatprep.subr.mxu0 0.0
    %256 = vmatpush1.msra.mxu0 %v235
    %257 = vmatprep.subr.mxu0 0.0
    %258 = vmatpush1.msra.mxu0 %v234
    %259 = vmatprep.subr.mxu0 0.0
    %260 = vmatpush1.msra.mxu0 %v233
    %261 = vmatprep.subr.mxu0 0.0
    %262 = vmatpush1.msra.mxu0 %v232
    %263 = vmatprep.subr.mxu0 0.0
    %264 = vmatpush1.msra.mxu0 %v231
    %265 = vmatprep.subr.mxu0 0.0
    %266 = vmatpush1.msra.mxu0 %v230
    %267 = vmatprep.subr.mxu0 0.0
    %268 = vmatpush1.msra.mxu0 %v229
    %269 = vmatprep.subr.mxu0 0.0
    %270 = vmatpush1.msra.mxu0 %v228
    %271 = vmatprep.subr.mxu0 0.0
    %272 = vmatpush1.msra.mxu0 %v227
    %273 = vmatprep.subr.mxu0 0.0
    %274 = vmatpush1.msra.mxu0 %v226
    %275 = vmatprep.subr.mxu0 0.0
    %276 = vmatpush1.msra.mxu0 %v225
    %277 = vmatprep.subr.mxu0 0.0
    %278 = vmatpush1.msra.mxu0 %v224
    %279 = vmatprep.subr.mxu0 0.0
    %280 = vmatpush2.msra.mxu0 0.0
    %281 = vmatprep.subr.mxu0 0.0
    %282 = vmatpush2.msra.mxu0 0.0
    %283 = vmatprep.subr.mxu0 0.0
    %284 = vmatpush2.msra.mxu0 0.0
    %285 = vmatprep.subr.mxu0 0.0
    %286 = vmatpush2.msra.mxu0 0.0
    %287 = vmatprep.subr.mxu0 0.0
    %288 = vmatpush2.msra.mxu0 0.0
    %289 = vmatprep.subr.mxu0 0.0
    %290 = vmatpush2.msra.mxu0 0.0
    %291 = vmatprep.subr.mxu0 0.0
    %292 = vmatpush2.msra.mxu0 0.0
    %293 = vmatprep.subr.mxu0 0.0
    %294 = vmatpush2.msra.mxu0 0.0
    %295 = vmatprep.subr.mxu0 0.0
    %296 = vmatpush2.msra.mxu0 0.0
    %297 = vmatprep.subr.mxu0 0.0
    %298 = vmatpush2.msra.mxu0 0.0
    %299 = vmatprep.subr.mxu0 0.0
    %300 = vmatpush2.msra.mxu0 0.0
    %301 = vmatprep.subr.mxu0 0.0
    %302 = vmatpush2.msra.mxu0 0.0
    %303 = vmatprep.subr.mxu0 0.0
    %304 = vmatpush2.msra.mxu0 0.0
    %305 = vmatprep.subr.mxu0 0.0
    %306 = vmatpush2.msra.mxu0 0.0
    %307 = vmatprep.subr.mxu0 0.0
    %308 = vmatpush2.msra.mxu0 0.0
    %309 = vmatprep.subr.mxu0 0.0
    %310 = vmatpush2.msra.mxu0 0.0
    %311 = vmatprep.mubr.f32.mxu0 0.0
    %312 = vmatmul.mubr.f32.gmra.mxu0 %v223
    %v313 = vpop.f32.mrf.mxu0
    %v314 = vadd.f32 %v245, %v313
    %v315 = vpop.f32.mrf.mxu0
    %316 = vdwg.mxu0
    %v317 = vmul.f32 %v314, 0.5
    %v318 = vtanh.pop %v317
    %v319 = vmul.f32 %v318, 0.5
    %v320 = vadd.f32 %v319, 0.5
    %v321 = vmul.f32 %v320, %v219
    %v322 = vadd.f32 %v128, %v321
    %v323 = vmax.f32 %v314, 0.0
    %v324 = vld [vmem:[%s8] sm:$0xff]
    %v325 = vld [vmem:[%s8 + $0x8] sm:$0xff]
    %v326 = vld [vmem:[%s8 + $0x10] sm:$0xff]
    %v327 = vld [vmem:[%s8 + $0x18] sm:$0xff]
    %329 = vrot.lane.b32.xlu0 %v323, 96
    %v330 = vpop.permute.xlu0 %329
    %332 = vrot.lane.b32.xlu0 %v219, 96
    %v333 = vpop.permute.xlu0 %332
    %v335 = vsel %vm55, %v330, 0
    %337 = vmatprep.subr.mxu0 0.0
    %338 = vmatpush1.msra.mxu0 0.0
    %339 = vmatprep.subr.mxu0 0.0
    %340 = vmatpush1.msra.mxu0 0.0
    %341 = vmatprep.subr.mxu0 0.0
    %342 = vmatpush1.msra.mxu0 0.0
    %343 = vmatprep.subr.mxu0 0.0
    %344 = vmatpush1.msra.mxu0 0.0
    %345 = vmatprep.subr.mxu0 0.0
    %346 = vmatpush1.msra.mxu0 0.0
    %347 = vmatprep.subr.mxu0 0.0
    %348 = vmatpush1.msra.mxu0 0.0
    %349 = vmatprep.subr.mxu0 0.0
    %350 = vmatpush1.msra.mxu0 0.0
    %351 = vmatprep.subr.mxu0 0.0
    %352 = vmatpush1.msra.mxu0 0.0
    %353 = vmatprep.subr.mxu0 0.0
    %354 = vmatpush1.msra.mxu0 0.0
    %355 = vmatprep.subr.mxu0 0.0
    %356 = vmatpush1.msra.mxu0 0.0
    %357 = vmatprep.subr.mxu0 0.0
    %358 = vmatpush1.msra.mxu0 0.0
    %359 = vmatprep.subr.mxu0 0.0
    %360 = vmatpush1.msra.mxu0 0.0
    %361 = vmatprep.subr.mxu0 0.0
    %362 = vmatpush1.msra.mxu0 %v327
    %363 = vmatprep.subr.mxu0 0.0
    %364 = vmatpush1.msra.mxu0 %v326
    %365 = vmatprep.subr.mxu0 0.0
    %366 = vmatpush1.msra.mxu0 %v325
    %367 = vmatprep.subr.mxu0 0.0
    %368 = vmatpush1.msra.mxu0 %v324
    %369 = vmatprep.subr.mxu0 0.0
    %370 = vmatpush2.msra.mxu0 0.0
    %371 = vmatprep.subr.mxu0 0.0
    %372 = vmatpush2.msra.mxu0 0.0
    %373 = vmatprep.subr.mxu0 0.0
    %374 = vmatpush2.msra.mxu0 0.0
    %375 = vmatprep.subr.mxu0 0.0
    %376 = vmatpush2.msra.mxu0 0.0
    %377 = vmatprep.subr.mxu0 0.0
    %378 = vmatpush2.msra.mxu0 0.0
    %379 = vmatprep.subr.mxu0 0.0
    %380 = vmatpush2.msra.mxu0 0.0
    %381 = vmatprep.subr.mxu0 0.0
    %382 = vmatpush2.msra.mxu0 0.0
    %383 = vmatprep.subr.mxu0 0.0
    %384 = vmatpush2.msra.mxu0 0.0
    %385 = vmatprep.subr.mxu0 0.0
    %386 = vmatpush2.msra.mxu0 0.0
    %387 = vmatprep.subr.mxu0 0.0
    %388 = vmatpush2.msra.mxu0 0.0
    %389 = vmatprep.subr.mxu0 0.0
    %390 = vmatpush2.msra.mxu0 0.0
    %391 = vmatprep.subr.mxu0 0.0
    %392 = vmatpush2.msra.mxu0 0.0
    %393 = vmatprep.subr.mxu0 0.0
    %394 = vmatpush2.msra.mxu0 0.0
    %395 = vmatprep.subr.mxu0 0.0
    %396 = vmatpush2.msra.mxu0 0.0
    %397 = vmatprep.subr.mxu0 0.0
    %398 = vmatpush2.msra.mxu0 0.0
    %399 = vmatprep.subr.mxu0 0.0
    %400 = vmatpush2.msra.mxu0 0.0
    %401 = vmatprep.mubr.f32.mxu0 0.0
    %402 = vmatmul.mubr.f32.gmra.mxu0 %v335
    %v403 = vpop.f32.mrf.mxu0
    %v404 = vadd.f32 %v333, %v403
    %v405 = vpop.f32.mrf.mxu0
    %406 = vdwg.mxu0
    %v407 = vmax.f32 %v404, 0.0
    %v408 = vand.u32 2147483647, %v404
    %v409 = vsub.f32 0.0, %v408
    %v410 = vmul.f32 %v409, 1.442695
    %v411 = vpow.pop %v410
    %v412 = vadd.f32 %v411, 1.0
    %v413 = vlog2.pop %v412
    %v414 = vmul.f32 %v413, 0.6931472
    %v415 = vmul.f32 -0.5, %v411
    %v416 = vadd.f32 %v415, 1.0
    %v417 = vmul.f32 %v416, %v411
    %v418 = vand.u32 2147483647, %v411
    %vm419 = vcmp.lt.f32.partialorder %v418, 0.0004427343
    %v420 = vsel %vm419, %v417, %v414
    %v421 = vadd.f32 %v407, %v420
    %423 = vrot.lane.b32.xlu0 %v421, 32
    %v424 = vpop.permute.xlu0 %423
    %v426 = vsel %vm55, %v322, %v424
    %vm427 = vcmask 523264
    %428 = vst.msk [vmem:[#allocation2] sm:$0xff] %vm427, %v426
    // Predicated region
    $region38: #{tpu_custom_call.1} parent=1 // pred_check
      _
    $region39: #{tpu_custom_call.1} parent=1 // pred_check_branch
      %430 = sbr.rel (0) target = $region41
    $region40: #{tpu_custom_call.1} parent=1 // pred_region
      %s432 = ssub.s32 128, 128
      %433 = vsyncadd [#allocation3], %s432
      %s435 = sshll.u32 [#allocation2], 4
      %s436 = int_to_ptr.vmem [resolvable:$true] %s435
      %438 = dma.vmem_to_hbm [thread:$0]  %s436, 128, %s9, [#allocation3]
    $region41: #{tpu_custom_call.1} parent=1 // pred_fallthru
      _
    // Predicated region
    $region42: #{tpu_custom_call.1} parent=1 // pred_check
      _
    $region43: #{tpu_custom_call.1} parent=1 // pred_check_branch
      %440 = sbr.rel (0) target = $region45
    $region44: #{tpu_custom_call.1} parent=1 // pred_region
      %441 = dma.done [#allocation3], 128
    $region45: #{tpu_custom_call.1} parent=1 // pred_fallthru
      _
    %442 = vsyncpa [#allocation3], 1

</llo_original>
